<compile_context>
chip_gen: v5e
topology: v5e:2x2
jax: 0.10.0
libtpu: 0.0.40
codegen_flags: <defaults>
</compile_context>

<pallas_src>
import functools

import jax
import jax.numpy as jnp
from jax import lax
from jax.experimental import pallas as pl
from jax.experimental.pallas import tpu as pltpu


# ----------------------------- module helpers ------------------------------
def get_padding(kernel_size, stride, dilation=1):
    return (stride - 1 + dilation * (kernel_size - 1)) // 2


def make_div(v, divisor=8):
    min_value = divisor
    new_v = max(min_value, int(v + divisor / 2) // divisor * divisor)
    if new_v < 0.9 * v:
        new_v += divisor
    return new_v


_VMEM = pl.BlockSpec(memory_space=pltpu.MemorySpace.VMEM)
_VMEM_LIMIT = 48 * 1024 * 1024       # explicit scoped-VMEM limit (fits v7x's 64 MiB)
_CONV1_BUDGET = 6 * 1024 * 1024      # byte budget for 1x1-conv row tiles
_CONV3_BUDGET = 8 * 1024 * 1024      # byte budget for 3x3-conv row tiles
_SUMS_BUDGET = 4 * 1024 * 1024
_GROUPS = 32
_GN_EPS = 1e-5


def _pick_tile(total, max_tile, align):
    """Largest divisor of `total` that is a multiple of `align` and <= max_tile."""
    for cand in range(min(max_tile, total), 0, -1):
        if total % cand == 0 and cand % align == 0:
            return cand
    return total


def _pick_row_tile(total, wo, row_bytes, budget, row_cap):
    """Largest divisor of `total` output rows within budget with (rows*wo)%8==0."""
    max_rows = max(1, min(budget // max(1, row_bytes), row_cap))
    for cand in range(min(total, max_rows), 0, -1):
        if total % cand:
            continue
        if (cand * wo) % 8 == 0 or cand == total:
            return cand
    return total


def _pad_dim(a, axis, new):
    pad = new - a.shape[axis]
    if pad == 0:
        return a
    cfg = [(0, 0)] * a.ndim
    cfg[axis] = (0, pad)
    return jnp.pad(a, cfg)


# ------------------------------ Pallas kernels ------------------------------
def _std_weight_kernel(w_ref, o_ref, *, eps):
    # Weight standardization per output channel (row).  Stats in f32, bf16 out.
    w = w_ref[...].astype(jnp.float32)                        # (O, K)
    mean = jnp.mean(w, axis=1, keepdims=True)
    var = jnp.maximum(jnp.mean(w * w, axis=1, keepdims=True) - mean * mean, 0.0)
    o_ref[...] = ((w - mean) * lax.rsqrt(var + eps)).astype(o_ref.dtype)


def _sums_kernel(x_ref, s_ref, ss_ref):
    # Per-channel sum / sum-of-squares for the stage input (norm1 of block 0).
    t = pl.program_id(1)

    @pl.when(t == 0)
    def _():
        s_ref[...] = jnp.zeros_like(s_ref)
        ss_ref[...] = jnp.zeros_like(ss_ref)

    x = x_ref[0].astype(jnp.float32)                          # (tm, C)
    s_ref[0] += jnp.sum(x, axis=0, keepdims=True)
    ss_ref[0] += jnp.sum(x * x, axis=0, keepdims=True)


def _gn_finalize_kernel(s_ref, ss_ref, g_ref, b_ref, scale_ref, shift_ref, *,
                        count, eps, num_groups):
    # Group-reduce channel sums -> per-channel scale = gamma * rsqrt(var+eps)
    # and shift = beta - mean * scale (applied as fused MAD in consumer kernels).
    c = s_ref.shape[-1]
    cg = c // num_groups
    ch = lax.broadcasted_iota(jnp.int32, (c, num_groups), 0)
    gr = lax.broadcasted_iota(jnp.int32, (c, num_groups), 1)
    gm = jnp.where(ch // cg == gr, 1.0, 0.0).astype(jnp.float32)      # (C, G)
    ch_t = lax.broadcasted_iota(jnp.int32, (num_groups, c), 1)
    gr_t = lax.broadcasted_iota(jnp.int32, (num_groups, c), 0)
    gm_t = jnp.where(ch_t // cg == gr_t, 1.0, 0.0).astype(jnp.float32)  # (G, C)

    s = s_ref[...][:, 0, :]                                   # (N, C)
    ss = ss_ref[...][:, 0, :]
    s_g = jnp.dot(s, gm, preferred_element_type=jnp.float32)
    ss_g = jnp.dot(ss, gm, preferred_element_type=jnp.float32)
    mean_g = s_g / count
    var_g = jnp.maximum(ss_g / count - mean_g * mean_g, 0.0)
    inv_g = lax.rsqrt(var_g + eps)
    mean_c = jnp.dot(mean_g, gm_t, preferred_element_type=jnp.float32)
    inv_c = jnp.dot(inv_g, gm_t, preferred_element_type=jnp.float32)
    scale = inv_c * g_ref[...]                                # (N, C)
    shift = b_ref[...] - mean_c * scale
    scale_ref[...] = scale[:, None, :]
    shift_ref[...] = shift[:, None, :]


def _gn_matmul_kernel(x_ref, sc_ref, sh_ref, w_ref, o_ref, s_ref, ss_ref):
    # relu(x*scale+shift) @ W  (1x1 StdConv fused with the preceding GN+ReLU),
    # with per-channel sum/ssq of the output accumulated for the next GN.
    mi = pl.program_id(1)
    a = jnp.maximum(x_ref[0].astype(jnp.float32) * sc_ref[0] + sh_ref[0], 0.0)
    acc = jnp.dot(a.astype(jnp.bfloat16), w_ref[...],
                  preferred_element_type=jnp.float32)
    o_ref[0] = acc.astype(o_ref.dtype)

    @pl.when(mi == 0)
    def _():
        s_ref[...] = jnp.zeros_like(s_ref)
        ss_ref[...] = jnp.zeros_like(ss_ref)

    s_ref[0] += jnp.sum(acc, axis=0, keepdims=True)
    ss_ref[0] += jnp.sum(acc * acc, axis=0, keepdims=True)


def _gn_matmul_add_kernel(x_ref, sc_ref, sh_ref, w_ref, r_ref, o_ref, s_ref, ss_ref):
    # relu(x*scale+shift) @ W + residual, plus stats of (conv3 + shortcut)
    # (= next block's norm1 statistics).
    mi = pl.program_id(1)
    a = jnp.maximum(x_ref[0].astype(jnp.float32) * sc_ref[0] + sh_ref[0], 0.0)
    acc = (jnp.dot(a.astype(jnp.bfloat16), w_ref[...],
                   preferred_element_type=jnp.float32)
           + r_ref[0].astype(jnp.float32))
    o_ref[0] = acc.astype(o_ref.dtype)

    @pl.when(mi == 0)
    def _():
        s_ref[...] = jnp.zeros_like(s_ref)
        ss_ref[...] = jnp.zeros_like(ss_ref)

    s_ref[0] += jnp.sum(acc, axis=0, keepdims=True)
    ss_ref[0] += jnp.sum(acc * acc, axis=0, keepdims=True)


def _gn_conv3x3_kernel(xm_ref, xh_ref, sc_ref, sh_ref, w_ref, o_ref, s_ref, ss_ref,
                       *, stride, dilation, tho, wo, h_in, w_in, pad):
    # Row-tiled 3x3 StdConv fused with the preceding GN+ReLU.  The padded
    # sample arrives stride-phase decomposed; each tile gets a small halo
    # block.  The border is masked back to zero (reference pads *after* the
    # norm), and the normalized activation is cast to bf16 once per phase.
    mi = pl.program_id(1)
    st, d = stride, dilation
    c = xm_ref.shape[-1]
    cout = w_ref.shape[-1]
    wps = xm_ref.shape[-2]
    halo = xh_ref.shape[-3]
    rows = tho + halo
    sc = sc_ref[0]                                            # (1, C)
    sh = sh_ref[0]

    row_l = lax.broadcasted_iota(jnp.int32, (rows, wps), 0)
    col_l = lax.broadcasted_iota(jnp.int32, (rows, wps), 1)

    xn = []
    for pi in range(st):
        row_list = []
        for pj in range(st):
            ph = pi * st + pj
            xm = xm_ref[0, ph, :, :, :].astype(jnp.float32)      # (tho, wps, C)
            xh = xh_ref[0, ph, 0, :, :, :].astype(jnp.float32)   # (halo, wps, C)
            xf = jnp.concatenate([xm, xh], axis=0)               # (rows, wps, C)
            a = jnp.maximum(xf * sc + sh, 0.0)
            grow = (mi * tho + row_l) * st + pi
            gcol = col_l * st + pj
            valid = ((grow >= pad) & (grow < pad + h_in)
                     & (gcol >= pad) & (gcol < pad + w_in))
            a = jnp.where(valid[:, :, None], a, 0.0)
            row_list.append(a.astype(jnp.bfloat16))
        xn.append(row_list)

    acc = jnp.zeros((tho * wo, cout), jnp.float32)
    for ki in range(3):
        for kj in range(3):
            phi, oi = (ki * d) % st, (ki * d) // st
            phj, oj = (kj * d) % st, (kj * d) // st
            a = xn[phi][phj][oi:oi + tho, oj:oj + wo, :].reshape(tho * wo, c)
            acc = acc + jnp.dot(a, w_ref[ki, kj, :, :],
                                preferred_element_type=jnp.float32)
    o_ref[0] = acc.astype(o_ref.dtype)

    @pl.when(mi == 0)
    def _():
        s_ref[...] = jnp.zeros_like(s_ref)
        ss_ref[...] = jnp.zeros_like(ss_ref)

    s_ref[0] += jnp.sum(acc, axis=0, keepdims=True)
    ss_ref[0] += jnp.sum(acc * acc, axis=0, keepdims=True)


# ------------------------------ Pallas wrappers ------------------------------
def std_weight_bf16(w4d, eps=1e-6):
    """StdConv2d weight standardization (hoisted, once per parameter set)."""
    o = w4d.shape[0]
    w2 = w4d.reshape(o, -1).astype(jnp.float32)
    out = pl.pallas_call(
        functools.partial(_std_weight_kernel, eps=eps),
        out_shape=jax.ShapeDtypeStruct(w2.shape, jnp.bfloat16),
        in_specs=[_VMEM],
        out_specs=_VMEM,
        compiler_params=pltpu.CompilerParams(vmem_limit_bytes=_VMEM_LIMIT),
    )(w2)
    return out.reshape(w4d.shape)


def channel_sums(x_rows):
    """Per-sample per-channel sum / sum-of-squares.  x_rows: (N, HW, C) bf16."""
    n, m, c = x_rows.shape
    max_tm = max(8, min(m, _SUMS_BUDGET // max(1, c * x_rows.dtype.itemsize)))
    tm = _pick_tile(m, max_tm, 8)
    return pl.pallas_call(
        _sums_kernel,
        grid=(n, m // tm),
        in_specs=[pl.BlockSpec((1, tm, c), lambda i, t: (i, t, 0))],
        out_specs=[pl.BlockSpec((1, 1, c), lambda i, t: (i, 0, 0)),
                   pl.BlockSpec((1, 1, c), lambda i, t: (i, 0, 0))],
        out_shape=[jax.ShapeDtypeStruct((n, 1, c), jnp.float32)] * 2,
        compiler_params=pltpu.CompilerParams(
            dimension_semantics=("parallel", "arbitrary"),
            vmem_limit_bytes=_VMEM_LIMIT),
    )(x_rows)


def gn_finalize(sums, ssqs, gamma2, beta2, count_rows,
                num_groups=_GROUPS, eps=_GN_EPS):
    """(sum, ssq, gamma, beta) -> per-channel (scale, shift) for GroupNorm."""
    n, _, c = sums.shape
    kernel = functools.partial(
        _gn_finalize_kernel, count=float(count_rows * (c // num_groups)),
        eps=eps, num_groups=num_groups)
    scale, shift = pl.pallas_call(
        kernel,
        out_shape=[jax.ShapeDtypeStruct((n, 1, c), jnp.float32)] * 2,
        in_specs=[_VMEM] * 4,
        out_specs=[_VMEM] * 2,
    )(sums, ssqs, gamma2, beta2)
    return scale, shift


def gn_scale_shift(sums, ssqs, gamma2, beta2, count_rows, c_pad):
    """Finalize GN stats over the real channels, pad scale/shift for pad channels."""
    c_real = gamma2.shape[-1]
    sc, sh = gn_finalize(sums[:, :, :c_real], ssqs[:, :, :c_real],
                         gamma2, beta2, count_rows)
    if c_pad > c_real:
        sc, sh = _pad_dim(sc, 2, c_pad), _pad_dim(sh, 2, c_pad)
    return sc, sh


def gn_conv1x1(x_rows, scale, shift, w_mat, residual=None):
    """relu(x*scale+shift) @ W (+ residual), bf16 I/O, GN stats in the epilogue."""
    n, m, cin = x_rows.shape
    cout = w_mat.shape[1]
    bytes_per_row = (2 * cin + 3 * cout) * 2 + 4 * cout
    max_tm = max(8, min(m, _CONV1_BUDGET // max(1, bytes_per_row)))
    tm = _pick_tile(m, max_tm, 8)
    grid = (n, m // tm)

    in_specs = [
        pl.BlockSpec((1, tm, cin), lambda i, mi: (i, mi, 0)),
        pl.BlockSpec((1, 1, cin), lambda i, mi: (i, 0, 0)),
        pl.BlockSpec((1, 1, cin), lambda i, mi: (i, 0, 0)),
        pl.BlockSpec((cin, cout), lambda i, mi: (0, 0)),
    ]
    args = [x_rows, scale, shift, w_mat]
    if residual is None:
        kernel = _gn_matmul_kernel
    else:
        kernel = _gn_matmul_add_kernel
        in_specs.append(pl.BlockSpec((1, tm, cout), lambda i, mi: (i, mi, 0)))
        args.append(residual)

    out, s_out, ss_out = pl.pallas_call(
        kernel,
        grid=grid,
        in_specs=in_specs,
        out_specs=[pl.BlockSpec((1, tm, cout), lambda i, mi: (i, mi, 0)),
                   pl.BlockSpec((1, 1, cout), lambda i, mi: (i, 0, 0)),
                   pl.BlockSpec((1, 1, cout), lambda i, mi: (i, 0, 0))],
        out_shape=[jax.ShapeDtypeStruct((n, m, cout), jnp.bfloat16),
                   jax.ShapeDtypeStruct((n, 1, cout), jnp.float32),
                   jax.ShapeDtypeStruct((n, 1, cout), jnp.float32)],
        compiler_params=pltpu.CompilerParams(
            dimension_semantics=("parallel", "arbitrary"),
            vmem_limit_bytes=_VMEM_LIMIT),
    )(*args)
    return out, s_out, ss_out


def gn_conv3x3(x_nhwc, scale, shift, w_taps, stride, dilation):
    """Row-tiled 3x3 StdConv (stride/dilation) fused with the preceding GN+ReLU."""
    n, h, w, c = x_nhwc.shape
    s, d = stride, dilation
    p = get_padding(3, s, d)
    cout = w_taps.shape[-1]
    ho = (h + 2 * p - 2 * d - 1) // s + 1
    wo = (w + 2 * p - 2 * d - 1) // s + 1
    halo = (2 * d) // s                               # extra phase-rows per tile

    wps = max(-(-(w + 2 * p) // s), wo + halo)
    row_bytes = (3 * s * s * wps * c * 2              # main block (x2 buf) + normalized copy
                 + 2 * wo * c * 2                     # tap slices in flight
                 + wo * cout * 4                      # f32 accumulator
                 + 2 * wo * cout * 2)                 # output block (x2 buf)
    tho = _pick_row_tile(ho, wo, row_bytes, _CONV3_BUDGET,
                         row_cap=max(1, 1024 // max(1, wo)))
    n_tiles = ho // tho

    hps = ho + halo
    hp_tot, wp_tot = hps * s, wps * s
    # Zero-pad, then split into stride phases so every tap reads a contiguous
    # window inside the kernel (for stride==1 this degenerates to a plain pad).
    # TODO(synk): for stride==1 this still costs one extra HBM round trip of
    # h1; reading a halo straight from the unpadded activation needs
    # Element-offset BlockSpecs or manual DMA.
    xp = jnp.pad(x_nhwc, ((0, 0), (p, hp_tot - h - p), (p, wp_tot - w - p), (0, 0)))
    x_ph = jnp.transpose(xp.reshape(n, hps, s, wps, s, c),
                         (0, 2, 4, 1, 3, 5)).reshape(n, s * s, hps, wps, c)
    # Per-tile halo rows gathered into their own (small) array so main blocks
    # never overlap.
    hidx = (jnp.arange(n_tiles)[:, None] + 1) * tho + jnp.arange(halo)[None, :]
    x_halo = x_ph[:, :, hidx, :, :]                   # (n, s*s, n_tiles, halo, wps, c)

    kernel = functools.partial(_gn_conv3x3_kernel, stride=s, dilation=d,
                               tho=tho, wo=wo, h_in=h, w_in=w, pad=p)
    out, s_out, ss_out = pl.pallas_call(
        kernel,
        grid=(n, n_tiles),
        in_specs=[
            pl.BlockSpec((1, s * s, tho, wps, c), lambda i, mi: (i, 0, mi, 0, 0)),
            pl.BlockSpec((1, s * s, 1, halo, wps, c),
                         lambda i, mi: (i, 0, mi, 0, 0, 0)),
            pl.BlockSpec((1, 1, c), lambda i, mi: (i, 0, 0)),
            pl.BlockSpec((1, 1, c), lambda i, mi: (i, 0, 0)),
            pl.BlockSpec((3, 3, c, cout), lambda i, mi: (0, 0, 0, 0)),
        ],
        out_specs=[pl.BlockSpec((1, tho * wo, cout), lambda i, mi: (i, mi, 0)),
                   pl.BlockSpec((1, 1, cout), lambda i, mi: (i, 0, 0)),
                   pl.BlockSpec((1, 1, cout), lambda i, mi: (i, 0, 0))],
        out_shape=[jax.ShapeDtypeStruct((n, ho * wo, cout), jnp.bfloat16),
                   jax.ShapeDtypeStruct((n, 1, cout), jnp.float32),
                   jax.ShapeDtypeStruct((n, 1, cout), jnp.float32)],
        compiler_params=pltpu.CompilerParams(
            dimension_semantics=("parallel", "arbitrary"),
            vmem_limit_bytes=_VMEM_LIMIT),
    )(x_ph, x_halo, scale, shift, w_taps)
    return out, (ho, wo), s_out, ss_out


# ------------------------- parameter initialization --------------------------
def init_params(key, in_chs, out_chs, stride, dilation, depth, bottle_ratio=0.25):
    first_dilation = 1 if dilation in (1, 2) else 2
    prev = in_chs
    blocks = []
    for i in range(depth):
        s = stride if i == 0 else 1
        mid = make_div(out_chs * bottle_ratio)
        ks = jax.random.split(jax.random.fold_in(key, i), 12)
        bp = {
            "stride": s,
            "first_dilation": first_dilation,
            "gn1_g": 1.0 + 0.1 * jax.random.normal(ks[0], (prev,), jnp.float32),
            "gn1_b": 0.1 * jax.random.normal(ks[1], (prev,), jnp.float32),
            "w1": 0.1 * jax.random.normal(ks[2], (mid, prev, 1, 1), jnp.float32),
            "gn2_g": 1.0 + 0.1 * jax.random.normal(ks[3], (mid,), jnp.float32),
            "gn2_b": 0.1 * jax.random.normal(ks[4], (mid,), jnp.float32),
            "w2": 0.1 * jax.random.normal(ks[5], (mid, mid, 3, 3), jnp.float32),
            "gn3_g": 1.0 + 0.1 * jax.random.normal(ks[6], (mid,), jnp.float32),
            "gn3_b": 0.1 * jax.random.normal(ks[7], (mid,), jnp.float32),
            "w3": 0.1 * jax.random.normal(ks[8], (out_chs, mid, 1, 1), jnp.float32),
        }
        if i == 0:
            # DownsampleConv: StdConv2d 1x1 with stride, preact=True -> no norm.
            bp["w_ds"] = 0.1 * jax.random.normal(ks[9], (out_chs, prev, 1, 1),
                                                 jnp.float32)
        blocks.append(bp)
        prev = out_chs
        first_dilation = dilation
    return blocks


def prepare_params(blocks):
    """Hoisted weight standardization, bf16 matmul layouts, mid padded to 128."""
    prepared = []
    for bp in blocks:
        mid = bp["w1"].shape[0]
        out_c = bp["w3"].shape[0]
        in_c = bp["w1"].shape[1]
        mid_p = ((mid + 127) // 128) * 128                       # lane-dense mid
        w1 = std_weight_bf16(bp["w1"]).reshape(mid, in_c).T      # (in_c, mid)
        w2 = jnp.transpose(std_weight_bf16(bp["w2"]), (2, 3, 1, 0))  # (3,3,mid,mid)
        w3 = std_weight_bf16(bp["w3"]).reshape(out_c, mid).T     # (mid, out_c)
        pp = {
            "gn1_g": bp["gn1_g"].reshape(1, -1).astype(jnp.float32),
            "gn1_b": bp["gn1_b"].reshape(1, -1).astype(jnp.float32),
            "gn2_g": bp["gn2_g"].reshape(1, -1).astype(jnp.float32),
            "gn2_b": bp["gn2_b"].reshape(1, -1).astype(jnp.float32),
            "gn3_g": bp["gn3_g"].reshape(1, -1).astype(jnp.float32),
            "gn3_b": bp["gn3_b"].reshape(1, -1).astype(jnp.float32),
            "w1_mat": _pad_dim(w1, 1, mid_p),                    # (in_c, mid_p)
            "w2_mat": _pad_dim(_pad_dim(w2, 2, mid_p), 3, mid_p),  # (3,3,mid_p,mid_p)
            "w3_mat": _pad_dim(w3, 0, mid_p),                    # (mid_p, out_c)
        }
        if "w_ds" in bp:
            pp["wds_mat"] = std_weight_bf16(bp["w_ds"]).reshape(out_c, in_c).T
        prepared.append(pp)
    return prepared


# ------------------------------- forward pass --------------------------------
def block_forward(x_rows, hw, sum1, ssq1, pp, stride, first_dilation):
    n, m, cin = x_rows.shape
    h, w = hw
    s, d = stride, first_dilation
    mid_p = pp["w1_mat"].shape[1]

    # norm1 scale/shift (stats were fused into the producer of x_rows)
    sc1, sh1 = gn_scale_shift(sum1, ssq1, pp["gn1_g"], pp["gn1_b"], m, cin)

    if "wds_mat" in pp:
        # DownsampleConv: 1x1 strided StdConv2d on x_preact (preact -> no norm).
        # TODO(synk): fold the ::s subsampling into the conv BlockSpec instead
        # of this small wrapper-side gather.
        xs = x_rows.reshape(n, h, w, cin)[:, ::s, ::s, :]
        hs_, ws_ = xs.shape[1], xs.shape[2]
        shortcut, _, _ = gn_conv1x1(xs.reshape(n, hs_ * ws_, cin), sc1, sh1,
                                    pp["wds_mat"])
    else:
        shortcut = x_rows                                        # identity (bf16)

    # conv1 (1x1) fused with norm1+ReLU; norm2 sums emitted in the epilogue.
    h1, s2, ss2 = gn_conv1x1(x_rows, sc1, sh1, pp["w1_mat"])
    sc2, sh2 = gn_scale_shift(s2, ss2, pp["gn2_g"], pp["gn2_b"], m, mid_p)

    # conv2 (3x3, stride s, dilation d) fused with norm2+ReLU; norm3 sums emitted.
    h2, (ho, wo), s3, ss3 = gn_conv3x3(h1.reshape(n, h, w, mid_p), sc2, sh2,
                                       pp["w2_mat"], s, d)
    sc3, sh3 = gn_scale_shift(s3, ss3, pp["gn3_g"], pp["gn3_b"], ho * wo, mid_p)

    # conv3 (1x1) fused with norm3+ReLU, drop_path(Identity) and residual add;
    # the epilogue sums are the next block's norm1 statistics.
    out, s_next, ss_next = gn_conv1x1(h2, sc3, sh3, pp["w3_mat"], residual=shortcut)
    return out, (ho, wo), s_next, ss_next


def resnet_stage_forward(x_nchw, params, meta):
    x = jnp.transpose(x_nchw, (0, 2, 3, 1)).astype(jnp.bfloat16)   # NCHW -> NHWC bf16
    n, h, w, c = x.shape
    x_rows = x.reshape(n, h * w, c)
    sums, ssqs = channel_sums(x_rows)                              # block-0 norm1 stats
    for pp, (stride, first_dilation) in zip(params, meta):
        x_rows, (h, w), sums, ssqs = block_forward(
            x_rows, (h, w), sums, ssqs, pp, stride, first_dilation)
    out = x_rows.reshape(n, h, w, -1).astype(jnp.float32)
    return jnp.transpose(out, (0, 3, 1, 2))                        # NHWC -> NCHW


# ----------------------------- pure-JAX reference ----------------------------
def _ref_std_weight(w, eps=1e-6):
    o = w.shape[0]
    w2 = w.reshape(o, -1)
    m = w2.mean(axis=1, keepdims=True)
    v = w2.var(axis=1, keepdims=True)
    return ((w2 - m) / jnp.sqrt(v + eps)).reshape(w.shape)


def _ref_gn_relu(x, gamma, beta, groups=32, eps=1e-5):
    n, h, w, c = x.shape
    xg = x.reshape(n, h, w, groups, c // groups)
    mean = xg.mean(axis=(1, 2, 4), keepdims=True)
    var = xg.var(axis=(1, 2, 4), keepdims=True)
    y = ((xg - mean) / jnp.sqrt(var + eps)).reshape(n, h, w, c) * gamma + beta
    return jnp.maximum(y, 0.0)


def _ref_conv(x, w, stride, dilation, padding):
    return lax.conv_general_dilated(
        x, jnp.transpose(w, (2, 3, 1, 0)), (stride, stride),
        [(padding, padding), (padding, padding)],
        rhs_dilation=(dilation, dilation),
        dimension_numbers=("NHWC", "HWIO", "NHWC"))


def ref_block(x, bp):
    s, d = bp["stride"], bp["first_dilation"]
    xp = _ref_gn_relu(x, bp["gn1_g"], bp["gn1_b"])
    shortcut = x
    if "w_ds" in bp:
        shortcut = _ref_conv(xp, _ref_std_weight(bp["w_ds"]), s, 1, 0)
    h1 = _ref_conv(xp, _ref_std_weight(bp["w1"]), 1, 1, 0)
    h1 = _ref_gn_relu(h1, bp["gn2_g"], bp["gn2_b"])
    h2 = _ref_conv(h1, _ref_std_weight(bp["w2"]), s, d, get_padding(3, s, d))
    h2 = _ref_gn_relu(h2, bp["gn3_g"], bp["gn3_b"])
    h3 = _ref_conv(h2, _ref_std_weight(bp["w3"]), 1, 1, 0)
    return h3 + shortcut


def ref_stage(x_nchw, blocks):
    x = jnp.transpose(x_nchw, (0, 2, 3, 1))
    for bp in blocks:
        x = ref_block(x, bp)
    return jnp.transpose(x, (0, 3, 1, 2))


# ---------------------------------- main -------------------------------------
if __name__ == "__main__":
    key = jax.random.PRNGKey(0)
    # GroupNorm uses 32 groups, so channel counts must be multiples of 32.
    N, in_chs, H, W = 2, 64, 8, 8
    out_chs, stride, dilation, depth = 128, 2, 1, 2   # mid_chs = make_div(32) = 32

    kx, kp = jax.random.split(key)
    x = jax.random.normal(kx, (N, in_chs, H, W), dtype=jnp.float32)  # NCHW
    blocks = init_params(kp, in_chs, out_chs, stride, dilation, depth)

    # Hoisted (once per parameter set): weight standardization -> bf16 weights.
    prepared = prepare_params(blocks)
    meta = tuple((bp["stride"], bp["first_dilation"]) for bp in blocks)

    fwd = jax.jit(resnet_stage_forward, static_argnums=2)
    y = fwd(x, prepared, meta)
    jax.block_until_ready(y)

    assert y.shape == (N, out_chs, H // stride, W // stride), y.shape
    assert bool(jnp.all(jnp.isfinite(y)))

    # Correctness check against a pure-JAX f32 reference (bf16 I/O tolerance).
    y_ref = ref_stage(x, blocks)
    ref_max = float(jnp.max(jnp.abs(y_ref)))
    err = float(jnp.max(jnp.abs(y - y_ref)))
    assert err <= 0.05 * ref_max + 0.05, (err, ref_max)

    print("KERNEL_OK")
</pallas_src>

<mosaic_0001>
module attributes {stable_mosaic.version = 11 : i64} {
  func.func @_std_weight_kernel(%arg0: memref<32x64xf32, #tpu.memory_space<vmem>>, %arg1: memref<32x64xbf16, #tpu.memory_space<vmem>>) attributes {dimension_semantics = [], scalar_prefetch = 0 : i64, scratch_operands = 0 : i64, tpu.core_type = #tpu.core_type<tc>} {
    %c0 = arith.constant 0 : index
    %c0_0 = arith.constant 0 : index
    %0 = vector.load %arg0[%c0, %c0_0] : memref<32x64xf32, #tpu.memory_space<vmem>>, vector<32x64xf32>
    %cst = arith.constant dense<0.000000e+00> : vector<32xf32>
    %1 = vector.multi_reduction <add>, %0, %cst [1] : vector<32x64xf32> to vector<32xf32>
    %2 = vector.shape_cast %1 : vector<32xf32> to vector<32x1xf32>
    %cst_1 = arith.constant 6.400000e+01 : f32
    %3 = vector.broadcast %cst_1 : f32 to vector<32x1xf32>
    %4 = arith.divf %2, %3 : vector<32x1xf32>
    %5 = arith.mulf %0, %0 : vector<32x64xf32>
    %cst_2 = arith.constant dense<0.000000e+00> : vector<32xf32>
    %6 = vector.multi_reduction <add>, %5, %cst_2 [1] : vector<32x64xf32> to vector<32xf32>
    %7 = vector.shape_cast %6 : vector<32xf32> to vector<32x1xf32>
    %cst_3 = arith.constant 6.400000e+01 : f32
    %8 = vector.broadcast %cst_3 : f32 to vector<32x1xf32>
    %9 = arith.divf %7, %8 : vector<32x1xf32>
    %10 = arith.mulf %4, %4 : vector<32x1xf32>
    %11 = arith.subf %9, %10 : vector<32x1xf32>
    %cst_4 = arith.constant 0.000000e+00 : f32
    %12 = vector.broadcast %cst_4 : f32 to vector<32x1xf32>
    %13 = arith.maximumf %11, %12 : vector<32x1xf32>
    %14 = vector.broadcast %4 : vector<32x1xf32> to vector<32x64xf32>
    %15 = arith.subf %0, %14 : vector<32x64xf32>
    %cst_5 = arith.constant 9.99999997E-7 : f32
    %16 = vector.broadcast %cst_5 : f32 to vector<32x1xf32>
    %17 = arith.addf %13, %16 : vector<32x1xf32>
    %18 = math.rsqrt %17 : vector<32x1xf32>
    %19 = vector.broadcast %18 : vector<32x1xf32> to vector<32x64xf32>
    %20 = arith.mulf %15, %19 : vector<32x64xf32>
    %21 = arith.truncf %20 : vector<32x64xf32> to vector<32x64xbf16>
    %c0_6 = arith.constant 0 : index
    %c0_7 = arith.constant 0 : index
    %22 = vector.load %arg1[%c0_6, %c0_7] : memref<32x64xbf16, #tpu.memory_space<vmem>>, vector<32x64xbf16>
    tpu.vector_store %arg1[%c0_6, %c0_7], %21 {strides = array<i32>} : memref<32x64xbf16, #tpu.memory_space<vmem>>, vector<32x64xbf16>,
    return
  }
}

</mosaic_0001>

<llo_original>
// kernel: tpu_custom_call.1
$region0: #{tpu_custom_call.1}
  #allocation0 [shape = 'u32[]', space=smem, size = 0x4, offset = 0x4, fixed_abs, tag = 'smem constant byte address 0x4 - core index']
  #allocation1 [shape = 'u32[72,128]{1,0:T(1,128)}', space=vmem, size = 0x9000, scoped, tag = 'internal scratch']
  %s0 = inlined_call_operand.hbm [shape: f32[32,64], index: 0, kind: input, shape index: {}]
  %s1 = inlined_call_operand.hbm [shape: bf16[32,64], index: 1, kind: output, shape index: {}]
  %s2 = sld [smem:[#allocation0]]
  $region18: #{tpu_custom_call.1} parent=0
    _
  %s4 = ssub.s32 1, %s2
  %s5 = scalar_select 0, %s4, %s2
  $region1: #{tpu_custom_call.1} parent=0
    #allocation2 [shape = 'u8[16384]{0}', space=vmem, size = 0x4000, scoped, tag = 'input window, operand 0, single buffered']
    #allocation3 [shape = 's32[1]{0}', space=sflag, size = 0x4, scoped, tag = 'scoped memory for tpu_custom_call.1']
    #allocation4 [shape = 's32[1]{0}', space=sflag, size = 0x4, scoped, tag = 'scoped memory for tpu_custom_call.1']
    #allocation5 [shape = 'u8[8192]{0}', space=vmem, size = 0x2000, scoped, tag = 'output window, operand 0, single buffered']
    %6 = vsyncpa [#allocation3], 0
    %7 = vsyncpa [#allocation4], 0
    // Predicated region
    $region2: #{tpu_custom_call.1} parent=1 // pred_check
      _
    $region3: #{tpu_custom_call.1} parent=1 // pred_check_branch
      %9 = sbr.rel (0) target = $region5
    $region4: #{tpu_custom_call.1} parent=1 // pred_region
      %11 = vsyncadd [#allocation3], 0
      %s12 = sshll.u32 %s0, 4
      %s13 = int_to_ptr.hbm [resolvable:$true] %s12
      %s14 = sshll.u32 [#allocation2], 4
      %s15 = int_to_ptr.vmem [resolvable:$true] %s14
      %20 = dma.hbm_to_vmem [thread:$0]  %s13, 512, %s15, [#allocation3], 128, 128, 8
    $region5: #{tpu_custom_call.1} parent=1 // pred_fallthru
      _
    // Predicated region
    $region6: #{tpu_custom_call.1} parent=1 // pred_check
      _
    $region7: #{tpu_custom_call.1} parent=1 // pred_check_branch
      %22 = sbr.rel (0) target = $region9
    $region8: #{tpu_custom_call.1} parent=1 // pred_region
      %24 = dma.done [#allocation3], 512
    $region9: #{tpu_custom_call.1} parent=1 // pred_fallthru
      _
    %v25 = vld [vmem:[#allocation2] sm:$0xff]
    %v26 = vld [vmem:[#allocation2 + $0x8] sm:$0xff]
    %v27 = vld [vmem:[#allocation2 + $0x10] sm:$0xff]
    %v28 = vld [vmem:[#allocation2 + $0x18] sm:$0xff]
    %vm29 = vcmask 523264
    %v30 = vsel %vm29, %v25, 0.0
    %31 = vadd.xlane.f32.xlu0 %v30
    %v32 = vpop.xlane.xlu0 %31
    %v33 = vsel %vm29, %v26, 0.0
    %34 = vadd.xlane.f32.xlu0 %v33
    %v35 = vpop.xlane.xlu0 %34
    %v36 = vsel %vm29, %v27, 0.0
    %37 = vadd.xlane.f32.xlu0 %v36
    %v38 = vpop.xlane.xlu0 %37
    %v39 = vsel %vm29, %v28, 0.0
    %40 = vadd.xlane.f32.xlu0 %v39
    %v41 = vpop.xlane.xlu0 %40
    %v42 = vrcp.pop 64.0
    %v43 = vmul.f32 64.0, %v42
    %v44 = vsub.f32 1.0, %v43
    %v45 = vmul.f32 %v42, %v44
    %v46 = vadd.f32 %v42, %v45
    %vm47 = vweird.f32 %v42
    %v48 = vsel %vm47, %v42, %v46
    %v49 = vmul.f32 %v32, %v48
    %v50 = vmul.f32 %v35, %v48
    %v51 = vmul.f32 %v38, %v48
    %v52 = vmul.f32 %v41, %v48
    %v53 = vmul.f32 %v25, %v25
    %v54 = vmul.f32 %v26, %v26
    %v55 = vmul.f32 %v27, %v27
    %v56 = vmul.f32 %v28, %v28
    %v57 = vsel %vm29, %v53, 0.0
    %58 = vadd.xlane.f32.xlu0 %v57
    %v59 = vpop.xlane.xlu0 %58
    %v60 = vsel %vm29, %v54, 0.0
    %61 = vadd.xlane.f32.xlu0 %v60
    %v62 = vpop.xlane.xlu0 %61
    %v63 = vsel %vm29, %v55, 0.0
    %64 = vadd.xlane.f32.xlu0 %v63
    %v65 = vpop.xlane.xlu0 %64
    %v66 = vsel %vm29, %v56, 0.0
    %67 = vadd.xlane.f32.xlu0 %v66
    %v68 = vpop.xlane.xlu0 %67
    %v69 = vmul.f32 %v59, %v48
    %v70 = vmul.f32 %v62, %v48
    %v71 = vmul.f32 %v65, %v48
    %v72 = vmul.f32 %v68, %v48
    %v73 = vmul.f32 %v49, %v49
    %v74 = vmul.f32 %v50, %v50
    %v75 = vmul.f32 %v51, %v51
    %v76 = vmul.f32 %v52, %v52
    %v77 = vsub.f32 %v69, %v73
    %v78 = vsub.f32 %v70, %v74
    %v79 = vsub.f32 %v71, %v75
    %v80 = vsub.f32 %v72, %v76
    %v81 = vmax.f32 %v77, 0.0
    %v82 = vmax.f32 %v78, 0.0
    %v83 = vmax.f32 %v79, 0.0
    %v84 = vmax.f32 %v80, 0.0
    %v85 = vsub.f32 %v25, %v49
    %v86 = vsub.f32 %v26, %v50
    %v87 = vsub.f32 %v27, %v51
    %v88 = vsub.f32 %v28, %v52
    %v89 = vadd.f32 %v81, 1e-06
    %v90 = vadd.f32 %v82, 1e-06
    %v91 = vadd.f32 %v83, 1e-06
    %v92 = vadd.f32 %v84, 1e-06
    %v93 = vrsqrt.pop %v89
    %v94 = vmul.f32 %v93, %v89
    %v95 = vmul.f32 %v94, %v93
    %v96 = vmul.f32 0.5, %v95
    %v97 = vsub.f32 1.5, %v96
    %v98 = vmul.f32 %v93, %v97
    %vm99 = vweird.f32 %v89
    %vm100 = vweird.f32 %v93
    %vm101 = vmor %vm99, %vm100
    %v102 = vsel %vm101, %v93, %v98
    %v103 = vrsqrt.pop %v90
    %v104 = vmul.f32 %v103, %v90
    %v105 = vmul.f32 %v104, %v103
    %v106 = vmul.f32 0.5, %v105
    %v107 = vsub.f32 1.5, %v106
    %v108 = vmul.f32 %v103, %v107
    %vm109 = vweird.f32 %v90
    %vm110 = vweird.f32 %v103
    %vm111 = vmor %vm109, %vm110
    %v112 = vsel %vm111, %v103, %v108
    %v113 = vrsqrt.pop %v91
    %v114 = vmul.f32 %v113, %v91
    %v115 = vmul.f32 %v114, %v113
    %v116 = vmul.f32 0.5, %v115
    %v117 = vsub.f32 1.5, %v116
    %v118 = vmul.f32 %v113, %v117
    %vm119 = vweird.f32 %v91
    %vm120 = vweird.f32 %v113
    %vm121 = vmor %vm119, %vm120
    %v122 = vsel %vm121, %v113, %v118
    %v123 = vrsqrt.pop %v92
    %v124 = vmul.f32 %v123, %v92
    %v125 = vmul.f32 %v124, %v123
    %v126 = vmul.f32 0.5, %v125
    %v127 = vsub.f32 1.5, %v126
    %v128 = vmul.f32 %v123, %v127
    %vm129 = vweird.f32 %v92
    %vm130 = vweird.f32 %v123
    %vm131 = vmor %vm129, %vm130
    %v132 = vsel %vm131, %v123, %v128
    %v133 = vmul.f32 %v85, %v102
    %v134 = vmul.f32 %v86, %v112
    %v135 = vmul.f32 %v87, %v122
    %v136 = vmul.f32 %v88, %v132
    %v137 = vpack.c.bf16 %v133, %v133
    %v138 = vpack.c.bf16 %v134, %v134
    %v139 = vpack.c.bf16 %v135, %v135
    %v140 = vpack.c.bf16 %v136, %v136
    %vm141 = vcmask 519168
    %142 = vst.msk [vmem:[#allocation5] sm:$0xf] %vm141, %v137
    %143 = vst.msk [vmem:[#allocation5 + $0x4] sm:$0xf] %vm141, %v138
    %144 = vst.msk [vmem:[#allocation5 + $0x8] sm:$0xf] %vm141, %v139
    %145 = vst.msk [vmem:[#allocation5 + $0xc] sm:$0xf] %vm141, %v140
    // Predicated region
    $region10: #{tpu_custom_call.1} parent=1 // pred_check
      _
    $region11: #{tpu_custom_call.1} parent=1 // pred_check_branch
      %147 = sbr.rel (0) target = $region13
    $region12: #{tpu_custom_call.1} parent=1 // pred_region
      %149 = vsyncadd [#allocation4], 0
      %s150 = sshll.u32 [#allocation5], 4
      %s151 = int_to_ptr.vmem [resolvable:$true] %s150
      %s152 = sshll.u32 %s1, 4
      %s153 = int_to_ptr.hbm [resolvable:$true] %s152
      %158 = dma.vmem_to_hbm [thread:$0]  %s151, 256, %s153, [#allocation4], 64, 64, 4
    $region13: #{tpu_custom_call.1} parent=1 // pred_fallthru
      _
    // Predicated region
    $region14: #{tpu_custom_call.1} parent=1 // pred_check
      _
    $region15: #{tpu_custom_call.1} parent=1 // pred_check_branch
      %160 = sbr.rel (0) target = $region17
    $region16: #{tpu_custom_call.1} parent=1 // pred_region
      %162 = dma.done [#allocation4], 256
    $region17: #{tpu_custom_call.1} parent=1 // pred_fallthru
      _
    %163 = vsyncpa [#allocation3], 1
    %164 = vsyncpa [#allocation4], 1

</llo_original>
